<compile_context>
chip_gen: v6e
topology: v6e:2x2x1
jax: 0.10.0
libtpu: 0.0.40
codegen_flags: <defaults>
</compile_context>

<pallas_src>
import jax
import jax.numpy as jnp
from jax.experimental import pallas as pl
from jax.experimental.pallas import tpu as pltpu


def _basic2dtrans_kernel(xa_ref, xb_ref, w_ref, scale_ref, shift_ref, o_ref):
    # xa_ref:    (1, TH, W+1, C)  bf16  -- TH input rows of this tile
    # xb_ref:    (1, 1,  W+1, C)  bf16  -- 1-row bottom halo
    # w_ref:     (4*C, KO)        bf16  -- tap-packed rows / quadrant-packed cols
    # scale_ref: (1, KO)          f32   -- folded BN scale (zero in pad columns)
    # shift_ref: (1, KO)          f32   -- folded BN shift
    # o_ref:     (1, TH, W, KO)   bf16  -- quadrant-packed output tile
    _, TH, Wp, C = xa_ref.shape
    W = Wp - 1
    KO = o_ref.shape[-1]

    xa = xa_ref[0]                                        # (TH, W+1, C)
    xb = xb_ref[0]                                        # (1,  W+1, C)
    # Rows shifted down by one (bottom taps); only the last row needs the halo.
    if TH > 1:
        x_lo = jnp.concatenate([xa[1:], xb], axis=0)      # (TH, W+1, C)
    else:
        x_lo = xb

    # Four spatial taps merged along K -> ONE MXU matmul per tile (K = 4*C).
    p00 = xa[:, :W, :]
    p01 = xa[:, 1:, :]
    p10 = x_lo[:, :W, :]
    p11 = x_lo[:, 1:, :]
    patches = jnp.concatenate([p00, p01, p10, p11], axis=-1).reshape(TH * W, 4 * C)

    acc = jnp.dot(patches, w_ref[...], preferred_element_type=jnp.float32)  # (TH*W, KO) f32

    # Fused inference-BN + ReLU epilogue in f32, cast to bf16 on the store.
    out = jnp.maximum(acc * scale_ref[...] + shift_ref[...], 0.0)
    o_ref[...] = out.astype(o_ref.dtype).reshape(1, TH, W, KO)


def _round_up(x, m):
    return ((x + m - 1) // m) * m


def _pick_tile_h(H, W, ko):
    """Number of output (== input) rows handled per grid step."""
    out_row_bytes = W * ko * 2                      # bf16 output bytes per tile row
    # ~2 MiB output-tile target: long DMA bursts and few grid steps, while the
    # double-buffered working set (2x in + 2x out + f32 acc + weights) stays a
    # few MiB -- far inside v7x's 64 MiB VMEM and the 48 MiB limit set below.
    th = max(1, (2 * 1024 * 1024) // max(out_row_bytes, 1))
    # At least ~512 matmul rows (M = TH*W) so the MXU pass is filled...
    th = max(th, -(-512 // max(W, 1)))
    # ...but never let the output tile exceed ~4 MiB.
    th = min(th, max(1, (4 * 1024 * 1024) // max(out_row_bytes, 1)))
    return max(1, min(th, H))


def _forward(x_nchw, weight_iohw, gamma, beta, running_mean, running_var, eps):
    """ConvTranspose2d(k=3,s=2,p=1,op=1,bias=False) + BatchNorm(inference) + ReLU.

    Returns NCHW bfloat16 (cast to f32 downstream if full precision is needed).
    """
    N, C, H, W = x_nchw.shape
    OC = weight_iohw.shape[1]
    KO = _round_up(4 * OC, 128)                 # packed quadrant dim, lane-dense
    TH = _pick_tile_h(H, W, KO)
    Hp = _round_up(H, TH)                       # zero-row padded H (sliced off after)

    # ---- glue: layout + parameter packing (fuses under jit) -----------------
    # NCHW -> NHWC, plus (Hp - H + 1) zero rows at the bottom (tile padding +
    # the single halo row a k=3,s=2,p=1,op=1 transposed conv needs) and one
    # zero column at the right.
    x_nhwc = jnp.transpose(x_nchw, (0, 2, 3, 1))
    x_pad = jnp.pad(
        x_nhwc, ((0, 0), (0, Hp - H + 1), (0, 1), (0, 0))).astype(jnp.bfloat16)

    # Pack weights so that
    #   out[n, oc, 2i+dy, 2j+dx] = sum_{a,b,c} x_pad[n, i+a, j+b, c] *
    #                              W_all[(2a+b)*C + c, (2dy+dx)*OC + oc]
    # with W_all[...] = w[c, oc, dy+1-2a, dx+1-2b] when that kernel tap exists.
    # Columns beyond 4*OC are zero padding (purely for lane-dense stores).
    w_all = jnp.zeros((4 * C, KO), jnp.float32)
    for a in (0, 1):
        for b in (0, 1):
            for dy in (0, 1):
                for dx in (0, 1):
                    kh = dy + 1 - 2 * a
                    kw = dx + 1 - 2 * b
                    if 0 <= kh < 3 and 0 <= kw < 3:
                        t = 2 * a + b
                        q = 2 * dy + dx
                        w_all = w_all.at[t * C:(t + 1) * C,
                                         q * OC:(q + 1) * OC].set(
                                             weight_iohw[:, :, kh, kw])
    w_all = w_all.astype(jnp.bfloat16)

    # Fold inference BatchNorm into per-output-channel scale/shift, tiled over
    # the 4 contiguous quadrant blocks and zero-padded to KO.
    scale = gamma / jnp.sqrt(running_var + eps)
    shift = beta - running_mean * scale
    scale4 = jnp.pad(jnp.tile(scale, 4), (0, KO - 4 * OC)).reshape(1, KO)
    shift4 = jnp.pad(jnp.tile(shift, 4), (0, KO - 4 * OC)).reshape(1, KO)

    grid = (N, Hp // TH)

    out_q = pl.pallas_call(
        _basic2dtrans_kernel,
        out_shape=jax.ShapeDtypeStruct((N, Hp, W, KO), jnp.bfloat16),
        grid_spec=pltpu.PrefetchScalarGridSpec(
            num_scalar_prefetch=0,
            grid=grid,
            in_specs=[
                # TH-row tile of the (bottom/right zero-padded) input.
                pl.BlockSpec((1, TH, W + 1, C), lambda n, h: (n, h, 0, 0)),
                # 1-row bottom halo: padded-input row (h+1)*TH (block size 1).
                pl.BlockSpec((1, 1, W + 1, C), lambda n, h: (n, (h + 1) * TH, 0, 0)),
                pl.BlockSpec((4 * C, KO), lambda n, h: (0, 0)),
                pl.BlockSpec((1, KO), lambda n, h: (0, 0)),
                pl.BlockSpec((1, KO), lambda n, h: (0, 0)),
            ],
            out_specs=pl.BlockSpec((1, TH, W, KO), lambda n, h: (n, h, 0, 0)),
        ),
        compiler_params=pltpu.CompilerParams(
            dimension_semantics=("parallel", "parallel"),
            vmem_limit_bytes=48 * 1024 * 1024,
        ),
    )(x_pad, x_pad, w_all, scale4, shift4)

    # Drop H padding + channel padding, depth-to-space (pixel shuffle) in bf16,
    # back to NCHW.
    out_q = out_q[:, :H, :, :4 * OC].reshape(N, H, W, 2, 2, OC)   # (N,H,W,dy,dx,OC)
    out_nhwc = out_q.transpose(0, 1, 3, 2, 4, 5).reshape(N, 2 * H, 2 * W, OC)
    return jnp.transpose(out_nhwc, (0, 3, 1, 2))                  # NCHW, bf16


basic2dtrans_forward = jax.jit(_forward)


if __name__ == "__main__":
    key = jax.random.PRNGKey(0)
    ks = jax.random.split(key, 6)

    N, C_IN, C_OUT, H, W = 2, 4, 8, 16, 16
    eps = 1e-5

    x = jax.random.normal(ks[0], (N, C_IN, H, W), dtype=jnp.float32)
    # PyTorch ConvTranspose2d weight layout: (in_channels, out_channels, kH, kW)
    weight = 0.1 * jax.random.normal(ks[1], (C_IN, C_OUT, 3, 3), dtype=jnp.float32)
    gamma = 1.0 + 0.1 * jax.random.normal(ks[2], (C_OUT,), dtype=jnp.float32)
    beta = 0.1 * jax.random.normal(ks[3], (C_OUT,), dtype=jnp.float32)
    run_mean = 0.1 * jax.random.normal(ks[4], (C_OUT,), dtype=jnp.float32)
    run_var = jnp.abs(1.0 + 0.1 * jax.random.normal(ks[5], (C_OUT,), dtype=jnp.float32))

    out = basic2dtrans_forward(x, weight, gamma, beta, run_mean, run_var, eps)
    jax.block_until_ready(out)

    # Reference: transposed conv via lhs-dilated regular conv (flipped kernel,
    # swapped in/out channels), then inference BN + ReLU, all in f32.
    w_conv = jnp.transpose(weight, (1, 0, 2, 3))[:, :, ::-1, ::-1]   # (OC, C, 3, 3)
    ref = jax.lax.conv_general_dilated(
        x, w_conv, window_strides=(1, 1), padding=((1, 2), (1, 2)),
        lhs_dilation=(2, 2), dimension_numbers=("NCHW", "OIHW", "NCHW"))
    r_scale = gamma / jnp.sqrt(run_var + eps)
    r_shift = beta - run_mean * r_scale
    ref = jnp.maximum(ref * r_scale[None, :, None, None] + r_shift[None, :, None, None], 0.0)

    assert out.shape == (N, C_OUT, 2 * H, 2 * W), out.shape
    # bf16 matmul operands + bf16 output store (f32 accumulation/epilogue) ->
    # relaxed tolerance vs. the f32 reference.
    out_f32 = out.astype(jnp.float32)
    err = float(jnp.max(jnp.abs(out_f32 - ref)))
    assert jnp.allclose(out_f32, ref, atol=2.5e-2, rtol=2.5e-2), err

    print("KERNEL_OK")
</pallas_src>

<mosaic_0001>
module attributes {stable_mosaic.version = 11 : i64} {
  func.func @_basic2dtrans_kernel(%arg0: i32, %arg1: i32, %arg2: memref<1x16x17x4xbf16, #tpu.memory_space<vmem>>, %arg3: memref<1x1x17x4xbf16, #tpu.memory_space<vmem>>, %arg4: memref<16x128xbf16, #tpu.memory_space<vmem>>, %arg5: memref<1x128xf32, #tpu.memory_space<vmem>>, %arg6: memref<1x128xf32, #tpu.memory_space<vmem>>, %arg7: memref<1x16x16x128xbf16, #tpu.memory_space<vmem>>) attributes {dimension_semantics = [#tpu.dimension_semantics<parallel>, #tpu.dimension_semantics<parallel>], iteration_bounds = array<i64: 2, 1>, scalar_prefetch = 0 : i64, scratch_operands = 0 : i64, tpu.core_type = #tpu.core_type<tc>, window_params = [{transform_indices = @transform_0, window_bounds = array<i64: 1, 16, 17, 4>}, {transform_indices = @transform_1, window_bounds = array<i64: 1, 1, 17, 4>}, {pipeline_mode = #tpu.pipeline_mode<synchronous>, transform_indices = @transform_2, window_bounds = array<i64: 16, 128>}, {pipeline_mode = #tpu.pipeline_mode<synchronous>, transform_indices = @transform_3, window_bounds = array<i64: 1, 128>}, {pipeline_mode = #tpu.pipeline_mode<synchronous>, transform_indices = @transform_4, window_bounds = array<i64: 1, 128>}, {transform_indices = @transform_5, window_bounds = array<i64: 1, 16, 16, 128>}]} {
    %c0 = arith.constant 0 : index
    %c0_0 = arith.constant 0 : index
    %c0_1 = arith.constant 0 : index
    %c0_2 = arith.constant 0 : index
    %0 = vector.load %arg2[%c0, %c0_0, %c0_1, %c0_2] : memref<1x16x17x4xbf16, #tpu.memory_space<vmem>>, vector<1x16x17x4xbf16>
    %1 = vector.shape_cast %0 : vector<1x16x17x4xbf16> to vector<16x17x4xbf16>
    %c0_3 = arith.constant 0 : index
    %c0_4 = arith.constant 0 : index
    %c0_5 = arith.constant 0 : index
    %c0_6 = arith.constant 0 : index
    %2 = vector.load %arg3[%c0_3, %c0_4, %c0_5, %c0_6] : memref<1x1x17x4xbf16, #tpu.memory_space<vmem>>, vector<1x1x17x4xbf16>
    %3 = vector.shape_cast %2 : vector<1x1x17x4xbf16> to vector<1x17x4xbf16>
    %4 = vector.extract_strided_slice %1 {offsets = [1, 0, 0], sizes = [15, 17, 4], strides = [1, 1, 1]} : vector<16x17x4xbf16> to vector<15x17x4xbf16>
    %5 = tpu.concatenate %4, %3 in 0 : vector<15x17x4xbf16>, vector<1x17x4xbf16> -> vector<16x17x4xbf16>
    %6 = vector.extract_strided_slice %1 {offsets = [0, 0, 0], sizes = [16, 16, 4], strides = [1, 1, 1]} : vector<16x17x4xbf16> to vector<16x16x4xbf16>
    %7 = vector.extract_strided_slice %1 {offsets = [0, 1, 0], sizes = [16, 16, 4], strides = [1, 1, 1]} : vector<16x17x4xbf16> to vector<16x16x4xbf16>
    %8 = vector.extract_strided_slice %5 {offsets = [0, 0, 0], sizes = [16, 16, 4], strides = [1, 1, 1]} : vector<16x17x4xbf16> to vector<16x16x4xbf16>
    %9 = vector.extract_strided_slice %5 {offsets = [0, 1, 0], sizes = [16, 16, 4], strides = [1, 1, 1]} : vector<16x17x4xbf16> to vector<16x16x4xbf16>
    %10 = tpu.concatenate %6, %7, %8, %9 in 2 : vector<16x16x4xbf16>, vector<16x16x4xbf16>, vector<16x16x4xbf16>, vector<16x16x4xbf16> -> vector<16x16x16xbf16>
    %11 = vector.shape_cast %10 : vector<16x16x16xbf16> to vector<256x16xbf16>
    %c0_7 = arith.constant 0 : index
    %c0_8 = arith.constant 0 : index
    %12 = vector.load %arg4[%c0_7, %c0_8] : memref<16x128xbf16, #tpu.memory_space<vmem>>, vector<16x128xbf16>
    %cst = arith.constant dense<0.000000e+00> : vector<256x128xf32>
    %13 = tpu.matmul %11, %12, %cst {dimension_numbers = #tpu.dot_dimension_numbers<[1], [0], [0], [1], [0, 0, 1, 1], [], []>} : vector<256x16xbf16>, vector<16x128xbf16>, vector<256x128xf32> -> vector<256x128xf32>
    %c0_9 = arith.constant 0 : index
    %c0_10 = arith.constant 0 : index
    %14 = vector.load %arg5[%c0_9, %c0_10] : memref<1x128xf32, #tpu.memory_space<vmem>>, vector<1x128xf32>
    %15 = vector.broadcast %14 : vector<1x128xf32> to vector<256x128xf32>
    %16 = arith.mulf %13, %15 : vector<256x128xf32>
    %c0_11 = arith.constant 0 : index
    %c0_12 = arith.constant 0 : index
    %17 = vector.load %arg6[%c0_11, %c0_12] : memref<1x128xf32, #tpu.memory_space<vmem>>, vector<1x128xf32>
    %18 = vector.broadcast %17 : vector<1x128xf32> to vector<256x128xf32>
    %19 = arith.addf %16, %18 : vector<256x128xf32>
    %cst_13 = arith.constant 0.000000e+00 : f32
    %20 = vector.broadcast %cst_13 : f32 to vector<256x128xf32>
    %21 = arith.maximumf %19, %20 : vector<256x128xf32>
    %22 = arith.truncf %21 : vector<256x128xf32> to vector<256x128xbf16>
    %23 = vector.shape_cast %22 : vector<256x128xbf16> to vector<1x16x16x128xbf16>
    %c0_14 = arith.constant 0 : index
    %c0_15 = arith.constant 0 : index
    %c0_16 = arith.constant 0 : index
    %c0_17 = arith.constant 0 : index
    %24 = vector.load %arg7[%c0_14, %c0_15, %c0_16, %c0_17] : memref<1x16x16x128xbf16, #tpu.memory_space<vmem>>, vector<1x16x16x128xbf16>
    tpu.vector_store %arg7[%c0_14, %c0_15, %c0_16, %c0_17], %23 {strides = array<i32>} : memref<1x16x16x128xbf16, #tpu.memory_space<vmem>>, vector<1x16x16x128xbf16>,
    return
  }
  func.func @transform_0(%arg0: i32, %arg1: i32) -> (i32, i32, i32, i32) {
    %c0_i32 = arith.constant 0 : i32
    %c0_i32_0 = arith.constant 0 : i32
    %c0_i32_1 = arith.constant 0 : i32
    return %arg0, %arg1, %c0_i32, %c0_i32_0 : i32, i32, i32, i32
  }
  func.func @transform_1(%arg0: i32, %arg1: i32) -> (i32, i32, i32, i32) {
    %c1_i32 = arith.constant 1 : i32
    %0 = arith.addi %arg1, %c1_i32 : i32
    %c16_i32 = arith.constant 16 : i32
    %1 = arith.muli %0, %c16_i32 : i32
    %c0_i32 = arith.constant 0 : i32
    %c0_i32_0 = arith.constant 0 : i32
    %c0_i32_1 = arith.constant 0 : i32
    return %arg0, %1, %c0_i32, %c0_i32_0 : i32, i32, i32, i32
  }
  func.func @transform_2(%arg0: i32, %arg1: i32) -> (i32, i32) {
    %c0_i32 = arith.constant 0 : i32
    %c0_i32_0 = arith.constant 0 : i32
    %c0_i32_1 = arith.constant 0 : i32
    return %c0_i32, %c0_i32_0 : i32, i32
  }
  func.func @transform_3(%arg0: i32, %arg1: i32) -> (i32, i32) {
    %c0_i32 = arith.constant 0 : i32
    %c0_i32_0 = arith.constant 0 : i32
    %c0_i32_1 = arith.constant 0 : i32
    return %c0_i32, %c0_i32_0 : i32, i32
  }
  func.func @transform_4(%arg0: i32, %arg1: i32) -> (i32, i32) {
    %c0_i32 = arith.constant 0 : i32
    %c0_i32_0 = arith.constant 0 : i32
    %c0_i32_1 = arith.constant 0 : i32
    return %c0_i32, %c0_i32_0 : i32, i32
  }
  func.func @transform_5(%arg0: i32, %arg1: i32) -> (i32, i32, i32, i32) {
    %c0_i32 = arith.constant 0 : i32
    %c0_i32_0 = arith.constant 0 : i32
    %c0_i32_1 = arith.constant 0 : i32
    return %arg0, %arg1, %c0_i32, %c0_i32_0 : i32, i32, i32, i32
  }
}

</mosaic_0001>

<llo_original>
// kernel: tile.18
$region0: #{tile.18}
  #allocation0 [shape = 's32[1]{0}', space=sflag, size = 0x4, scoped, tag = 'scoped memory for tile.18']
  %s0 = inlined_call_operand.vmem [shape: f32[8], index: 0, kind: input, shape index: {}]
  %s1 = inlined_call_operand.vmem [shape: f32[4,8], index: 1, kind: output, shape index: {}]
  // Predicated region
  $region2: #{tile.18} parent=0 // pred_check
    _
  $region3: #{tile.18} parent=0 // pred_check_branch
    %3 = sbr.rel (0) target = $region5
  $region4: #{tile.18} parent=0 // pred_region
    _
  $region5: #{tile.18} parent=0 // pred_fallthru
    _
  %v4 = vld [vmem:[%s0] ss:$0 sm:$0xff]
  %5 = vst [vmem:[%s1] sm:$0xf] %v4

// kernel: tile.19
$region0: #{tile.19}
  %s0 = inlined_call_operand.vmem [shape: f32[4,8], index: 0, kind: input, shape index: {}]
  %s1 = inlined_call_operand.vmem [shape: f32[32], index: 1, kind: output, shape index: {}]
  $region1: #{tile.19} parent=0
    #allocation0 [shape = 'u8[4096]{0}', space=vmem, size = 0x1000, scoped, tag = 'scoped mem for output reshape']
    #allocation1 [shape = 'u8[4096]{0}', space=vmem, size = 0x1000, scoped, tag = 'scoped mem for input reshape']
    %s3 = sshll.u32 1, 4
    %s4 = ssub.s32 %s3, 1
    %v5 = vld [vmem:[%s0] sm:%s4]
    %6 = vst [vmem:[#allocation1] sm:%s4] %v5
    %v7 = vld [vmem:[#allocation1] sm:$0x1]
    %vm8 = vcmask 64512
    %9 = vst.msk [vmem:[#allocation0] sm:$0x1] %vm8, %v7
    %s10 = scalar_lea.vmem [#allocation1], 3
    %v11 = vld [vmem:[%s10] sm:$0x1]
    %12 = vrot.lane.b32.xlu0 %v11, 24
    %v13 = vpop.permute.xlu0 %12
    %vm14 = vcmask 261312
    %15 = vst.msk [vmem:[#allocation0] sm:$0x1] %vm14, %v13
    %s16 = scalar_lea.vmem [#allocation1], 2
    %v17 = vld [vmem:[%s16] sm:$0x1]
    %18 = vrot.lane.b32.xlu0 %v17, 16
    %v19 = vpop.permute.xlu0 %18
    %vm20 = vcmask 195712
    %21 = vst.msk [vmem:[#allocation0] sm:$0x1] %vm20, %v19
    %s22 = scalar_lea.vmem [#allocation1], 1
    %v23 = vld [vmem:[%s22] sm:$0x1]
    %24 = vrot.lane.b32.xlu0 %v23, 8
    %v25 = vpop.permute.xlu0 %24
    %vm26 = vcmask 130112
    %27 = vst.msk [vmem:[#allocation0] sm:$0x1] %vm26, %v25
    %s29 = sshll.u32 1, 1
    %s30 = ssub.s32 %s29, 1
    %v32 = vld [vmem:[#allocation0] sm:%s30]
    %s33 = sshll.u32 1, 1
    %s34 = ssub.s32 %s33, 1
    %35 = vst [vmem:[%s1] sm:%s34] %v32

// kernel: _forward.1
$region0: #{_forward.1}
  #allocation0 [shape = 'u32[]', space=smem, size = 0x4, offset = 0x4, fixed_abs, tag = 'smem constant byte address 0x4 - core index']
  #allocation1 [shape = 'u32[144,128]{1,0:T(1,128)}', space=vmem, size = 0x12000, scoped, tag = 'internal scratch']
  %s0 = inlined_call_operand.vmem [shape: bf16[2,17,17,4], index: 0, kind: input, shape index: {}, may-alias: {0,1}]
  %s1 = inlined_call_operand.vmem [shape: bf16[2,17,17,4], index: 1, kind: input, shape index: {}, may-alias: {0,1}]
  %s2 = inlined_call_operand.vmem [shape: bf16[16,128], index: 2, kind: input, shape index: {}]
  %s3 = inlined_call_operand.vmem [shape: f32[1,128], index: 3, kind: input, shape index: {}]
  %s4 = inlined_call_operand.vmem [shape: f32[1,128], index: 4, kind: input, shape index: {}]
  %s5 = inlined_call_operand.vmem [shape: bf16[2,16,16,128], index: 5, kind: output, shape index: {}]
  %s6 = sld [smem:[#allocation0]]
  $region53: #{_forward.1} parent=0
    _
  %s8 = ssub.s32 1, %s6
  %s9 = scalar_select 0, %s8, %s6
  loop: start=0, step=1, limit=4
  $region2: #{_forward.1} parent=0 // loop_pre_header
    _
  $region3: #{_forward.1} parent=0 // loop_header
    %s11 = sphi 0, %s15
    %p12 = scmp.ge.s32.totalorder %s11, 4
    %s18 = sphi 0, %s30
    %s19 = sphi 0, %s26
    %s20 = sphi 0, %s18
    %s21 = sphi 0, %s19
    %s22 = sphi 0, %s20
    %s23 = sphi 0, %s21
    %s35 = sphi 0, %s37
    %s38 = sphi 0, %s35
    %s39 = sphi 0, %s38
    %s55 = sphi 0, %s39
    %s67 = sphi 0, %s69
    %s70 = sphi 0, %s67
    %s71 = sphi 0, %s70
    %s87 = sphi 0, %s71
    %s91 = sphi 0, %s91
    %s93 = sphi 0, %s91
    %s94 = sphi 0, %s93
    %s108 = sphi 0, %s94
    %s112 = sphi 0, %s112
    %s114 = sphi 0, %s112
    %s115 = sphi 0, %s114
    %s129 = sphi 0, %s115
    %s133 = sphi 0, %s133
    %s135 = sphi 0, %s133
    %s136 = sphi 0, %s135
    %s150 = sphi 0, %s136
    %s158 = sphi 0, %s160
    %s161 = sphi 0, %s158
    %s162 = sphi 0, %s161
    %s178 = sphi 0, %s162
  $region4: #{_forward.1} parent=0 // loop_header_branch
    %14 = sbr.rel (%p12) target = $region8
  $region5: #{_forward.1} parent=0 // loop_body
    %s16 = ssub.s32 %s11, 1
    %s17 = ssub.s32 %s11, 2
    %s24 = sadd.s32 1, %s19
    %p25 = scmp.ge.s32.totalorder %s24, 1
    %s26 = scalar_select %p25, 0, %s24
    %s27 = sadd.s32 1, %s18
    %s28 = scalar_select %p25, %s27, %s18
    %p29 = scmp.ge.s32.totalorder %s28, 2
    %s30 = scalar_select %p29, 0, %s28
    %s31 = ssub.s32 %s18, %s30
    %s32 = ssub.s32 %s19, %s26
    %s33 = sor.u32 %s31, %s32
    %p34 = scmp.eq.s32.totalorder %s33, 0
    %s36 = sadd.s32 %s35, 1
    %s37 = scalar_select %p34, %s35, %s36
    %p40 = pneg %p34
    %p41 = scmp.eq.s32.totalorder %s11, 1
    %p42 = por %p40, %p41
    %p43 = scmp.ne.s32.totalorder %s35, %s38
    %p44 = scmp.eq.s32.totalorder %s11, 0
    %p45 = por %p43, %p44
    %p46 = scmp.ne.s32.totalorder %s35, %s38
    %p47 = scmp.eq.s32.totalorder %s16, 1
    %p48 = por %p46, %p47
    %p49 = scmp.ne.s32.totalorder %s38, %s39
    %p50 = scmp.eq.s32.totalorder %s16, 0
    %p51 = por %p49, %p50
    %p52 = scmp.ne.s32.totalorder %s38, %s39
    %p53 = scmp.eq.s32.totalorder %s17, 1
    %p54 = por %p52, %p53
    %p56 = scmp.ne.s32.totalorder %s39, %s55
    %p57 = scmp.eq.s32.totalorder %s17, 0
    %p58 = por %p56, %p57
    %s59 = sadd.s32 %s19, 1
    %s60 = smul.u32 %s59, 16
    %s61 = sadd.s32 %s26, 1
    %s62 = smul.u32 %s61, 16
    %s63 = ssub.s32 %s18, %s30
    %s64 = ssub.s32 %s60, %s62
    %s65 = sor.u32 %s63, %s64
    %p66 = scmp.eq.s32.totalorder %s65, 0
    %s68 = sadd.s32 %s67, 1
    %s69 = scalar_select %p66, %s67, %s68
    %p72 = pneg %p66
    %p73 = scmp.eq.s32.totalorder %s11, 1
    %p74 = por %p72, %p73
    %p75 = scmp.ne.s32.totalorder %s67, %s70
    %p76 = scmp.eq.s32.totalorder %s11, 0
    %p77 = por %p75, %p76
    %p78 = scmp.ne.s32.totalorder %s67, %s70
    %p79 = scmp.eq.s32.totalorder %s16, 1
    %p80 = por %p78, %p79
    %p81 = scmp.ne.s32.totalorder %s70, %s71
    %p82 = scmp.eq.s32.totalorder %s16, 0
    %p83 = por %p81, %p82
    %p84 = scmp.ne.s32.totalorder %s70, %s71
    %p85 = scmp.eq.s32.totalorder %s17, 1
    %p86 = por %p84, %p85
    %p88 = scmp.ne.s32.totalorder %s71, %s87
    %p89 = scmp.eq.s32.totalorder %s17, 0
    %p90 = por %p88, %p89
    %s92 = sadd.s32 %s91, 1
    %p95 = scmp.eq.s32.totalorder %s11, 1
    %p96 = scmp.ne.s32.totalorder %s91, %s93
    %p97 = scmp.eq.s32.totalorder %s11, 0
    %p98 = por %p96, %p97
    %p99 = scmp.ne.s32.totalorder %s91, %s93
    %p100 = scmp.eq.s32.totalorder %s16, 1
    %p101 = por %p99, %p100
    %p102 = scmp.ne.s32.totalorder %s93, %s94
    %p103 = scmp.eq.s32.totalorder %s16, 0
    %p104 = por %p102, %p103
    %p105 = scmp.ne.s32.totalorder %s93, %s94
    %p106 = scmp.eq.s32.totalorder %s17, 1
    %p107 = por %p105, %p106
    %p109 = scmp.ne.s32.totalorder %s94, %s108
    %p110 = scmp.eq.s32.totalorder %s17, 0
    %p111 = por %p109, %p110
    %s113 = sadd.s32 %s112, 1
    %p116 = scmp.eq.s32.totalorder %s11, 1
    %p117 = scmp.ne.s32.totalorder %s112, %s114
    %p118 = scmp.eq.s32.totalorder %s11, 0
    %p119 = por %p117, %p118
    %p120 = scmp.ne.s32.totalorder %s112, %s114
    %p121 = scmp.eq.s32.totalorder %s16, 1
    %p122 = por %p120, %p121
    %p123 = scmp.ne.s32.totalorder %s114, %s115
    %p124 = scmp.eq.s32.totalorder %s16, 0
    %p125 = por %p123, %p124
    %p126 = scmp.ne.s32.totalorder %s114, %s115
    %p127 = scmp.eq.s32.totalorder %s17, 1
    %p128 = por %p126, %p127
    %p130 = scmp.ne.s32.totalorder %s115, %s129
    %p131 = scmp.eq.s32.totalorder %s17, 0
    %p132 = por %p130, %p131
    %s134 = sadd.s32 %s133, 1
    %p137 = scmp.eq.s32.totalorder %s11, 1
    %p138 = scmp.ne.s32.totalorder %s133, %s135
    %p139 = scmp.eq.s32.totalorder %s11, 0
    %p140 = por %p138, %p139
    %p141 = scmp.ne.s32.totalorder %s133, %s135
    %p142 = scmp.eq.s32.totalorder %s16, 1
    %p143 = por %p141, %p142
    %p144 = scmp.ne.s32.totalorder %s135, %s136
    %p145 = scmp.eq.s32.totalorder %s16, 0
    %p146 = por %p144, %p145
    %p147 = scmp.ne.s32.totalorder %s135, %s136
    %p148 = scmp.eq.s32.totalorder %s17, 1
    %p149 = por %p147, %p148
    %p151 = scmp.ne.s32.totalorder %s136, %s150
    %p152 = scmp.eq.s32.totalorder %s17, 0
    %p153 = por %p151, %p152
    %s154 = ssub.s32 %s18, %s30
    %s155 = ssub.s32 %s19, %s26
    %s156 = sor.u32 %s154, %s155
    %p157 = scmp.eq.s32.totalorder %s156, 0
    %s159 = sadd.s32 %s158, 1
    %s160 = scalar_select %p157, %s158, %s159
    %p163 = pneg %p157
    %p164 = scmp.eq.s32.totalorder %s11, 1
    %p165 = por %p163, %p164
    %p166 = scmp.ne.s32.totalorder %s158, %s161
    %p167 = scmp.eq.s32.totalorder %s11, 0
    %p168 = por %p166, %p167
    %p169 = scmp.ne.s32.totalorder %s158, %s161
    %p170 = scmp.eq.s32.totalorder %s16, 1
    %p171 = por %p169, %p170
    %p172 = scmp.ne.s32.totalorder %s161, %s162
    %p173 = scmp.eq.s32.totalorder %s16, 0
    %p174 = por %p172, %p173
    %p175 = scmp.ne.s32.totalorder %s161, %s162
    %p176 = scmp.eq.s32.totalorder %s17, 1
    %p177 = por %p175, %p176
    %p179 = scmp.ne.s32.totalorder %s162, %s178
    %p180 = scmp.eq.s32.totalorder %s17, 0
    %p181 = por %p179, %p180
    %p182 = scmp.le.s32.totalorder 1, %s11
    %p183 = scmp.lt.s32.totalorder %s11, 3
    %p184 = pnand %p182, %p183
    %p185 = pneg %p184
    // Predicated region
    $region9: #{_forward.1} parent=5 // pred_check
      _
    $region10: #{_forward.1} parent=5 // pred_check_branch
      %187 = sbr.rel (%p184) target = $region12
    $region11: #{_forward.1} parent=5 // pred_region
      %s188 = ssub.s32 %s11, 1
      // Predicated region
      $region13: #{_forward.1} parent=11 // pred_check
        %p189 = pneg %p104
      $region14: #{_forward.1} parent=11 // pred_check_branch
        %191 = sbr.rel (%p189) target = $region16
      $region15: #{_forward.1} parent=11 // pred_region
        _
      $region16: #{_forward.1} parent=11 // pred_fallthru
        _
      // Predicated region
      $region17: #{_forward.1} parent=11 // pred_check
        %p192 = pneg %p125
      $region18: #{_forward.1} parent=11 // pred_check_branch
        %194 = sbr.rel (%p192) target = $region20
      $region19: #{_forward.1} parent=11 // pred_region
        _
      $region20: #{_forward.1} parent=11 // pred_fallthru
        _
      // Predicated region
      $region21: #{_forward.1} parent=11 // pred_check
        %p195 = pneg %p146
      $region22: #{_forward.1} parent=11 // pred_check_branch
        %197 = sbr.rel (%p195) target = $region24
      $region23: #{_forward.1} parent=11 // pred_region
        _
      $region24: #{_forward.1} parent=11 // pred_fallthru
        _
    $region12: #{_forward.1} parent=5 // pred_fallthru
      _
    %p198 = scmp.lt.s32.totalorder %s11, 2
    // Predicated region
    $region25: #{_forward.1} parent=5 // pred_check
      %p199 = pneg %p198
    $region26: #{_forward.1} parent=5 // pred_check_branch
      %201 = sbr.rel (%p199) target = $region28
    $region27: #{_forward.1} parent=5 // pred_region
      // Predicated region
      $region29: #{_forward.1} parent=27 // pred_check
        %p202 = pneg %p45
      $region30: #{_forward.1} parent=27 // pred_check_branch
        %204 = sbr.rel (%p202) target = $region32
      $region31: #{_forward.1} parent=27 // pred_region
        %s205 = smul.u32 16, %s19
        %s206 = ssub.s32 17, %s205
        %p207 = scmp.lt.s32.totalorder %s206, 16
        %s208 = scalar_select %p207, %s206, 16
        %s209 = smul.u32 64, %s208
        %s210 = smul.u32 %s209, 3
        %p211 = scmp.lt.s32.totalorder %s18, 1
        %s212 = scalar_select %p211, %s18, 1
        %p213 = scmp.lt.s32.totalorder %s205, 16
        %s214 = scalar_select %p213, %s205, 16
        %s215 = smul.addr %s214, 3
        %s216 = smul.addr %s212, 51
        %s217 = sadd.s32 %s215, %s216
        %s218 = smul.addr %s217, 4
        %s219 = scalar_lea.vmem %s0, %s218
        %s220 = smul.u32 16, %s19
        %s221 = ssub.s32 17, %s220
        %p222 = scmp.lt.s32.totalorder %s221, 16
        %s223 = scalar_select %p222, %s221, 16
        %s224 = smul.u32 64, %s223
        %s225 = smul.u32 %s224, 3
      $region32: #{_forward.1} parent=27 // pred_fallthru
        _
      // Predicated region
      $region33: #{_forward.1} parent=27 // pred_check
        %p226 = pneg %p77
      $region34: #{_forward.1} parent=27 // pred_check_branch
        %228 = sbr.rel (%p226) target = $region36
      $region35: #{_forward.1} parent=27 // pred_region
        %s229 = sadd.s32 %s19, 1
        %s230 = smul.u32 %s229, 16
        %p231 = scmp.lt.s32.totalorder %s18, 1
        %s232 = scalar_select %p231, %s18, 1
        %p233 = scmp.lt.s32.totalorder %s230, 16
        %s234 = scalar_select %p233, %s230, 16
        %s235 = smul.addr %s234, 3
        %s236 = smul.addr %s232, 51
        %s237 = sadd.s32 %s235, %s236
        %s238 = smul.addr %s237, 4
        %s239 = scalar_lea.vmem %s1, %s238
        %s240 = sadd.s32 %s19, 1
        %s241 = smul.u32 %s240, 16
      $region36: #{_forward.1} parent=27 // pred_fallthru
        _
    $region28: #{_forward.1} parent=5 // pred_fallthru
      _
    %p242 = scmp.le.s32.totalorder 1, %s11
    %p243 = scmp.lt.s32.totalorder %s11, 3
    %p244 = pnand %p242, %p243
    %p245 = pneg %p244
    // Predicated region
    $region37: #{_forward.1} parent=5 // pred_check
      _
    $region38: #{_forward.1} parent=5 // pred_check_branch
      %247 = sbr.rel (%p244) target = $region40
    $region39: #{_forward.1} parent=5 // pred_region
      %s248 = ssub.s32 %s11, 1
      %s249 = smul.u32 16, %s21
      %s250 = ssub.s32 17, %s249
      %p251 = scmp.lt.s32.totalorder %s250, 16
      %s252 = scalar_select %p251, %s250, 16
      %s253 = smul.u32 64, %s252
      %s254 = smul.u32 %s253, 3
      %p255 = scmp.lt.s32.totalorder %s20, 1
      %s256 = scalar_select %p255, %s20, 1
      %p257 = scmp.lt.s32.totalorder %s249, 16
      %s258 = scalar_select %p257, %s249, 16
      %s259 = smul.addr %s258, 3
      %s260 = smul.addr %s256, 51
      %s261 = sadd.s32 %s259, %s260
      %s262 = smul.addr %s261, 4
      %s263 = scalar_lea.vmem %s0, %s262
      %p264 = pneg %p51
      %p265 = pneg %p48
      %s266 = sadd.s32 %s21, 1
      %s267 = smul.u32 %s266, 16
      %p268 = scmp.lt.s32.totalorder %s20, 1
      %s269 = scalar_select %p268, %s20, 1
      %p270 = scmp.lt.s32.totalorder %s267, 16
      %s271 = scalar_select %p270, %s267, 16
      %s272 = smul.addr %s271, 3
      %s273 = smul.addr %s269, 51
      %s274 = sadd.s32 %s272, %s273
      %s275 = smul.addr %s274, 4
      %s276 = scalar_lea.vmem %s1, %s275
      %p277 = pneg %p83
      %p278 = pneg %p80
      %p279 = pneg %p104
      %p280 = pneg %p101
      %p281 = pneg %p125
      %p282 = pneg %p122
      %p283 = pneg %p146
      %p284 = pneg %p143
      %p285 = pneg %p174
      %p286 = pneg %p171
      %s287 = smul.u32 16, %s21
      %p288 = scmp.lt.s32.totalorder %s20, 1
      %s289 = scalar_select %p288, %s20, 1
      %p290 = scmp.lt.s32.totalorder %s287, 15
      %s291 = scalar_select %p290, %s287, 15
      %s292 = smul.addr %s291, 2
      %s293 = smul.addr %s289, 32
      %s294 = sadd.s32 %s292, %s293
      %s295 = smul.addr %s294, 4
      %s296 = scalar_lea.vmem %s5, %s295
      %s297 = smul.u32 16, %s21
      %s298 = ssub.s32 17, %s297
      %p299 = scmp.lt.s32.totalorder %s298, 16
      %s300 = scalar_select %p299, %s298, 16
      %s301 = smul.u32 64, %s300
      %s302 = smul.u32 %s301, 3
      %p303 = scmp.lt.s32.totalorder %s20, 1
      %s304 = scalar_select %p303, %s20, 1
      %p305 = scmp.lt.s32.totalorder %s297, 16
      %s306 = scalar_select %p305, %s297, 16
      %s307 = smul.addr %s306, 3
      %s308 = smul.addr %s304, 51
      %s309 = sadd.s32 %s307, %s308
      %s310 = smul.addr %s309, 4
      %s311 = scalar_lea.vmem %s0, %s310
      %s312 = smul.u32 16, %s21
      %s313 = ssub.s32 17, %s312
      %p314 = scmp.lt.s32.totalorder %s313, 16
      %s315 = scalar_select %p314, %s313, 16
      %s316 = smul.u32 64, %s315
      %s317 = smul.u32 %s316, 3
      %s318 = sadd.s32 %s21, 1
      %s319 = smul.u32 %s318, 16
      %p320 = scmp.lt.s32.totalorder %s20, 1
      %s321 = scalar_select %p320, %s20, 1
      %p322 = scmp.lt.s32.totalorder %s319, 16
      %s323 = scalar_select %p322, %s319, 16
      %s324 = smul.addr %s323, 3
      %s325 = smul.addr %s321, 51
      %s326 = sadd.s32 %s324, %s325
      %s327 = smul.addr %s326, 4
      %s328 = scalar_lea.vmem %s1, %s327
      %s329 = sadd.s32 %s21, 1
      %s330 = smul.u32 %s329, 16
      %s331 = smul.u32 16, %s21
      %p332 = scmp.lt.s32.totalorder %s20, 1
      %s333 = scalar_select %p332, %s20, 1
      %p334 = scmp.lt.s32.totalorder %s331, 15
      %s335 = scalar_select %p334, %s331, 15
      %s336 = smul.addr %s335, 2
      %s337 = smul.addr %s333, 32
      %s338 = sadd.s32 %s336, %s337
      %s339 = smul.addr %s338, 4
      %s340 = scalar_lea.vmem %s5, %s339
      %s341 = smul.u32 16, %s21
      %v343 = vld [vmem:[%s311] sm:$0xf]
      %v344 = vld [vmem:[%s311 + $0x4] sm:$0xf]
      %v345 = vld [vmem:[%s311 + $0x8] sm:$0x1]
      %v346 = vld [vmem:[%s311 + $0xc] sm:$0xf]
      %v347 = vld [vmem:[%s311 + $0x10] sm:$0xf]
      %v348 = vld [vmem:[%s311 + $0x14] sm:$0x1]
      %v349 = vld [vmem:[%s311 + $0x18] sm:$0xf]
      %v350 = vld [vmem:[%s311 + $0x1c] sm:$0xf]
      %v351 = vld [vmem:[%s311 + $0x20] sm:$0x1]
      %v352 = vld [vmem:[%s311 + $0x24] sm:$0xf]
      %v353 = vld [vmem:[%s311 + $0x28] sm:$0xf]
      %v354 = vld [vmem:[%s311 + $0x2c] sm:$0x1]
      %v355 = vld [vmem:[%s311 + $0x30] sm:$0xf]
      %v356 = vld [vmem:[%s311 + $0x34] sm:$0xf]
      %v357 = vld [vmem:[%s311 + $0x38] sm:$0x1]
      %v358 = vld [vmem:[%s311 + $0x3c] sm:$0xf]
      %v359 = vld [vmem:[%s311 + $0x40] sm:$0xf]
      %v360 = vld [vmem:[%s311 + $0x44] sm:$0x1]
      %v361 = vld [vmem:[%s311 + $0x48] sm:$0xf]
      %v362 = vld [vmem:[%s311 + $0x4c] sm:$0xf]
      %v363 = vld [vmem:[%s311 + $0x50] sm:$0x1]
      %v364 = vld [vmem:[%s311 + $0x54] sm:$0xf]
      %v365 = vld [vmem:[%s311 + $0x58] sm:$0xf]
      %v366 = vld [vmem:[%s311 + $0x5c] sm:$0x1]
      %v367 = vld [vmem:[%s311 + $0x60] sm:$0xf]
      %v368 = vld [vmem:[%s311 + $0x64] sm:$0xf]
      %v369 = vld [vmem:[%s311 + $0x68] sm:$0x1]
      %v370 = vld [vmem:[%s311 + $0x6c] sm:$0xf]
      %v371 = vld [vmem:[%s311 + $0x70] sm:$0xf]
      %v372 = vld [vmem:[%s311 + $0x74] sm:$0x1]
      %v373 = vld [vmem:[%s311 + $0x78] sm:$0xf]
      %v374 = vld [vmem:[%s311 + $0x7c] sm:$0xf]
      %v375 = vld [vmem:[%s311 + $0x80] sm:$0x1]
      %v376 = vld [vmem:[%s311 + $0x84] sm:$0xf]
      %v377 = vld [vmem:[%s311 + $0x88] sm:$0xf]
      %v378 = vld [vmem:[%s311 + $0x8c] sm:$0x1]
      %v379 = vld [vmem:[%s311 + $0x90] sm:$0xf]
      %v380 = vld [vmem:[%s311 + $0x94] sm:$0xf]
      %v381 = vld [vmem:[%s311 + $0x98] sm:$0x1]
      %v382 = vld [vmem:[%s311 + $0x9c] sm:$0xf]
      %v383 = vld [vmem:[%s311 + $0xa0] sm:$0xf]
      %v384 = vld [vmem:[%s311 + $0xa4] sm:$0x1]
      %v385 = vld [vmem:[%s311 + $0xa8] sm:$0xf]
      %v386 = vld [vmem:[%s311 + $0xac] sm:$0xf]
      %v387 = vld [vmem:[%s311 + $0xb0] sm:$0x1]
      %v388 = vld [vmem:[%s311 + $0xb4] sm:$0xf]
      %v389 = vld [vmem:[%s311 + $0xb8] sm:$0xf]
      %v390 = vld [vmem:[%s311 + $0xbc] sm:$0x1]
      %v391 = vld [vmem:[%s328] sm:$0xf]
      %v392 = vld [vmem:[%s328 + $0x4] sm:$0xf]
      %v393 = vld [vmem:[%s328 + $0x8] sm:$0x1]
      %v426 = vunpack.c.l.b16 %v343
      %v427 = vunpack.c.l.b16 %v344
      %v428 = vunpack.c.l.b16 %v346
      %v429 = vunpack.c.l.b16 %v347
      %v430 = vunpack.c.l.b16 %v349
      %v431 = vunpack.c.l.b16 %v350
      %v432 = vunpack.c.l.b16 %v352
      %v433 = vunpack.c.l.b16 %v353
      %v434 = vunpack.c.l.b16 %v355
      %v435 = vunpack.c.l.b16 %v356
      %v436 = vunpack.c.l.b16 %v358
      %v437 = vunpack.c.l.b16 %v359
      %v438 = vunpack.c.l.b16 %v361
      %v439 = vunpack.c.l.b16 %v362
      %v440 = vunpack.c.l.b16 %v364
      %v441 = vunpack.c.l.b16 %v365
      %v442 = vunpack.c.l.b16 %v367
      %v443 = vunpack.c.l.b16 %v368
      %v444 = vunpack.c.l.b16 %v370
      %v445 = vunpack.c.l.b16 %v371
      %v446 = vunpack.c.l.b16 %v373
      %v447 = vunpack.c.l.b16 %v374
      %v448 = vunpack.c.l.b16 %v376
      %v449 = vunpack.c.l.b16 %v377
      %v450 = vunpack.c.l.b16 %v379
      %v451 = vunpack.c.l.b16 %v380
      %v452 = vunpack.c.l.b16 %v382
      %v453 = vunpack.c.l.b16 %v383
      %v454 = vunpack.c.l.b16 %v385
      %v455 = vunpack.c.l.b16 %v386
      %v456 = vunpack.c.l.b16 %v388
      %v457 = vunpack.c.l.b16 %v389
      %v458 = vpack.c.b16 %v427, %v426
      %v459 = vpack.c.b16 %v429, %v428
      %v460 = vpack.c.b16 %v431, %v430
      %v461 = vpack.c.b16 %v433, %v432
      %v462 = vpack.c.b16 %v435, %v434
      %v463 = vpack.c.b16 %v437, %v436
      %v464 = vpack.c.b16 %v439, %v438
      %v465 = vpack.c.b16 %v441, %v440
      %v466 = vpack.c.b16 %v443, %v442
      %v467 = vpack.c.b16 %v445, %v444
      %v468 = vpack.c.b16 %v447, %v446
      %v469 = vpack.c.b16 %v449, %v448
      %v470 = vpack.c.b16 %v451, %v450
      %v471 = vpack.c.b16 %v453, %v452
      %v472 = vpack.c.b16 %v455, %v454
      %v473 = vpack.c.b16 %v457, %v456
      %v490 = vunpack.c.l.b16 %v345
      %v491 = vunpack.c.l.b16 %v348
      %v492 = vunpack.c.l.b16 %v351
      %v493 = vunpack.c.l.b16 %v354
      %v494 = vunpack.c.l.b16 %v357
      %v495 = vunpack.c.l.b16 %v360
      %v496 = vunpack.c.l.b16 %v363
      %v497 = vunpack.c.l.b16 %v366
      %v498 = vunpack.c.l.b16 %v369
      %v499 = vunpack.c.l.b16 %v372
      %v500 = vunpack.c.l.b16 %v375
      %v501 = vunpack.c.l.b16 %v378
      %v502 = vunpack.c.l.b16 %v381
      %v503 = vunpack.c.l.b16 %v384
      %v504 = vunpack.c.l.b16 %v387
      %v505 = vunpack.c.l.b16 %v390
      %v506 = vpack.c.b16 %v490, %v490
      %v507 = vpack.c.b16 %v491, %v491
      %v508 = vpack.c.b16 %v492, %v492
      %v509 = vpack.c.b16 %v493, %v493
      %v510 = vpack.c.b16 %v494, %v494
      %v511 = vpack.c.b16 %v495, %v495
      %v512 = vpack.c.b16 %v496, %v496
      %v513 = vpack.c.b16 %v497, %v497
      %v514 = vpack.c.b16 %v498, %v498
      %v515 = vpack.c.b16 %v499, %v499
      %v516 = vpack.c.b16 %v500, %v500
      %v517 = vpack.c.b16 %v501, %v501
      %v518 = vpack.c.b16 %v502, %v502
      %v519 = vpack.c.b16 %v503, %v503
      %v520 = vpack.c.b16 %v504, %v504
      %v521 = vpack.c.b16 %v505, %v505
      %vm522 = vsmask.f32 7424
      %v524 = vshrl.u32 %v458, 16
      %v526 = vshll.u32 %v458, 16
      %v528 = vrot.slane %v526, 1
      %v529 = vor.u32 %v524, %v528
      %v531 = vshll.u32 %v506, 16
      %v533 = vrot.slane %v531, 1
      %v534 = vsel %vm522, %v529, %v533
      %v536 = vshrl.u32 %v459, 16
      %v538 = vshll.u32 %v459, 16
      %v540 = vrot.slane %v538, 1
      %v541 = vor.u32 %v536, %v540
      %v543 = vshll.u32 %v507, 16
      %v545 = vrot.slane %v543, 1
      %v546 = vsel %vm522, %v541, %v545
      %v548 = vshrl.u32 %v460, 16
      %v550 = vshll.u32 %v460, 16
      %v552 = vrot.slane %v550, 1
      %v553 = vor.u32 %v548, %v552
      %v555 = vshll.u32 %v508, 16
      %v557 = vrot.slane %v555, 1
      %v558 = vsel %vm522, %v553, %v557
      %v560 = vshrl.u32 %v461, 16
      %v562 = vshll.u32 %v461, 16
      %v564 = vrot.slane %v562, 1
      %v565 = vor.u32 %v560, %v564
      %v567 = vshll.u32 %v509, 16
      %v569 = vrot.slane %v567, 1
      %v570 = vsel %vm522, %v565, %v569
      %v572 = vshrl.u32 %v462, 16
      %v574 = vshll.u32 %v462, 16
      %v576 = vrot.slane %v574, 1
      %v577 = vor.u32 %v572, %v576
      %v579 = vshll.u32 %v510, 16
      %v581 = vrot.slane %v579, 1
      %v582 = vsel %vm522, %v577, %v581
      %v584 = vshrl.u32 %v463, 16
      %v586 = vshll.u32 %v463, 16
      %v588 = vrot.slane %v586, 1
      %v589 = vor.u32 %v584, %v588
      %v591 = vshll.u32 %v511, 16
      %v593 = vrot.slane %v591, 1
      %v594 = vsel %vm522, %v589, %v593
      %v596 = vshrl.u32 %v464, 16
      %v598 = vshll.u32 %v464, 16
      %v600 = vrot.slane %v598, 1
      %v601 = vor.u32 %v596, %v600
      %v603 = vshll.u32 %v512, 16
      %v605 = vrot.slane %v603, 1
      %v606 = vsel %vm522, %v601, %v605
      %v608 = vshrl.u32 %v465, 16
      %v610 = vshll.u32 %v465, 16
      %v612 = vrot.slane %v610, 1
      %v613 = vor.u32 %v608, %v612
      %v615 = vshll.u32 %v513, 16
      %v617 = vrot.slane %v615, 1
      %v618 = vsel %vm522, %v613, %v617
      %v620 = vshrl.u32 %v466, 16
      %v622 = vshll.u32 %v466, 16
      %v624 = vrot.slane %v622, 1
      %v625 = vor.u32 %v620, %v624
      %v627 = vshll.u32 %v514, 16
      %v629 = vrot.slane %v627, 1
      %v630 = vsel %vm522, %v625, %v629
      %v632 = vshrl.u32 %v467, 16
      %v634 = vshll.u32 %v467, 16
      %v636 = vrot.slane %v634, 1
      %v637 = vor.u32 %v632, %v636
      %v639 = vshll.u32 %v515, 16
      %v641 = vrot.slane %v639, 1
      %v642 = vsel %vm522, %v637, %v641
      %v644 = vshrl.u32 %v468, 16
      %v646 = vshll.u32 %v468, 16
      %v648 = vrot.slane %v646, 1
      %v649 = vor.u32 %v644, %v648
      %v651 = vshll.u32 %v516, 16
      %v653 = vrot.slane %v651, 1
      %v654 = vsel %vm522, %v649, %v653
      %v656 = vshrl.u32 %v469, 16
      %v658 = vshll.u32 %v469, 16
      %v660 = vrot.slane %v658, 1
      %v661 = vor.u32 %v656, %v660
      %v663 = vshll.u32 %v517, 16
      %v665 = vrot.slane %v663, 1
      %v666 = vsel %vm522, %v661, %v665
      %v668 = vshrl.u32 %v470, 16
      %v670 = vshll.u32 %v470, 16
      %v672 = vrot.slane %v670, 1
      %v673 = vor.u32 %v668, %v672
      %v675 = vshll.u32 %v518, 16
      %v677 = vrot.slane %v675, 1
      %v678 = vsel %vm522, %v673, %v677
      %v680 = vshrl.u32 %v471, 16
      %v682 = vshll.u32 %v471, 16
      %v684 = vrot.slane %v682, 1
      %v685 = vor.u32 %v680, %v684
      %v687 = vshll.u32 %v519, 16
      %v689 = vrot.slane %v687, 1
      %v690 = vsel %vm522, %v685, %v689
      %v692 = vshrl.u32 %v472, 16
      %v694 = vshll.u32 %v472, 16
      %v696 = vrot.slane %v694, 1
      %v697 = vor.u32 %v692, %v696
      %v699 = vshll.u32 %v520, 16
      %v701 = vrot.slane %v699, 1
      %v702 = vsel %vm522, %v697, %v701
      %v704 = vshrl.u32 %v473, 16
      %v706 = vshll.u32 %v473, 16
      %v708 = vrot.slane %v706, 1
      %v709 = vor.u32 %v704, %v708
      %v711 = vshll.u32 %v521, 16
      %v713 = vrot.slane %v711, 1
      %v714 = vsel %vm522, %v709, %v713
      %715 = vrot.lane.b32.xlu0 %v534, 4
      %v716 = vpop.permute.xlu0 %715
      %717 = vrot.lane.b32.xlu0 %v546, 4
      %v718 = vpop.permute.xlu0 %717
      %719 = vrot.lane.b32.xlu0 %v558, 4
      %v720 = vpop.permute.xlu0 %719
      %721 = vrot.lane.b32.xlu0 %v570, 4
      %v722 = vpop.permute.xlu0 %721
      %723 = vrot.lane.b32.xlu0 %v582, 4
      %v724 = vpop.permute.xlu0 %723
      %725 = vrot.lane.b32.xlu0 %v594, 4
      %v726 = vpop.permute.xlu0 %725
      %727 = vrot.lane.b32.xlu0 %v606, 4
      %v728 = vpop.permute.xlu0 %727
      %729 = vrot.lane.b32.xlu0 %v618, 4
      %v730 = vpop.permute.xlu0 %729
      %731 = vrot.lane.b32.xlu0 %v630, 4
      %v732 = vpop.permute.xlu0 %731
      %733 = vrot.lane.b32.xlu0 %v642, 4
      %v734 = vpop.permute.xlu0 %733
      %735 = vrot.lane.b32.xlu0 %v654, 4
      %v736 = vpop.permute.xlu0 %735
      %737 = vrot.lane.b32.xlu0 %v666, 4
      %v738 = vpop.permute.xlu0 %737
      %739 = vrot.lane.b32.xlu0 %v678, 4
      %v740 = vpop.permute.xlu0 %739
      %741 = vrot.lane.b32.xlu0 %v690, 4
      %v742 = vpop.permute.xlu0 %741
      %743 = vrot.lane.b32.xlu0 %v702, 4
      %v744 = vpop.permute.xlu0 %743
      %745 = vrot.lane.b32.xlu0 %v714, 4
      %v746 = vpop.permute.xlu0 %745
      %v749 = vunpack.c.l.b16 %v391
      %v750 = vunpack.c.l.b16 %v392
      %v751 = vpack.c.b16 %v750, %v749
      %752 = vrot.lane.b32.xlu0 %v459, 8
      %v753 = vpop.permute.xlu0 %752
      %754 = vrot.lane.b32.xlu0 %v460, 8
      %v755 = vpop.permute.xlu0 %754
      %756 = vrot.lane.b32.xlu0 %v461, 8
      %v757 = vpop.permute.xlu0 %756
      %758 = vrot.lane.b32.xlu0 %v462, 8
      %v759 = vpop.permute.xlu0 %758
      %760 = vrot.lane.b32.xlu0 %v463, 8
      %v761 = vpop.permute.xlu0 %760
      %762 = vrot.lane.b32.xlu0 %v464, 8
      %v763 = vpop.permute.xlu0 %762
      %764 = vrot.lane.b32.xlu0 %v465, 8
      %v765 = vpop.permute.xlu0 %764
      %766 = vrot.lane.b32.xlu0 %v466, 8
      %v767 = vpop.permute.xlu0 %766
      %768 = vrot.lane.b32.xlu0 %v467, 8
      %v769 = vpop.permute.xlu0 %768
      %770 = vrot.lane.b32.xlu0 %v468, 8
      %v771 = vpop.permute.xlu0 %770
      %772 = vrot.lane.b32.xlu0 %v469, 8
      %v773 = vpop.permute.xlu0 %772
      %774 = vrot.lane.b32.xlu0 %v470, 8
      %v775 = vpop.permute.xlu0 %774
      %776 = vrot.lane.b32.xlu0 %v471, 8
      %v777 = vpop.permute.xlu0 %776
      %778 = vrot.lane.b32.xlu0 %v472, 8
      %v779 = vpop.permute.xlu0 %778
      %780 = vrot.lane.b32.xlu0 %v473, 8
      %v781 = vpop.permute.xlu0 %780
      %782 = vrot.lane.b32.xlu0 %v751, 8
      %v783 = vpop.permute.xlu0 %782
      %v785 = vunpack.c.l.b16 %v393
      %v786 = vpack.c.b16 %v785, %v785
      %v788 = vshrl.u32 %v751, 16
      %v790 = vshll.u32 %v751, 16
      %v792 = vrot.slane %v790, 1
      %v793 = vor.u32 %v788, %v792
      %v795 = vshll.u32 %v786, 16
      %v797 = vrot.slane %v795, 1
      %v798 = vsel %vm522, %v793, %v797
      %799 = vrot.lane.b32.xlu0 %v546, 12
      %v800 = vpop.permute.xlu0 %799
      %801 = vrot.lane.b32.xlu0 %v558, 12
      %v802 = vpop.permute.xlu0 %801
      %803 = vrot.lane.b32.xlu0 %v570, 12
      %v804 = vpop.permute.xlu0 %803
      %805 = vrot.lane.b32.xlu0 %v582, 12
      %v806 = vpop.permute.xlu0 %805
      %807 = vrot.lane.b32.xlu0 %v594, 12
      %v808 = vpop.permute.xlu0 %807
      %809 = vrot.lane.b32.xlu0 %v606, 12
      %v810 = vpop.permute.xlu0 %809
      %811 = vrot.lane.b32.xlu0 %v618, 12
      %v812 = vpop.permute.xlu0 %811
      %813 = vrot.lane.b32.xlu0 %v630, 12
      %v814 = vpop.permute.xlu0 %813
      %815 = vrot.lane.b32.xlu0 %v642, 12
      %v816 = vpop.permute.xlu0 %815
      %817 = vrot.lane.b32.xlu0 %v654, 12
      %v818 = vpop.permute.xlu0 %817
      %819 = vrot.lane.b32.xlu0 %v666, 12
      %v820 = vpop.permute.xlu0 %819
      %821 = vrot.lane.b32.xlu0 %v678, 12
      %v822 = vpop.permute.xlu0 %821
      %823 = vrot.lane.b32.xlu0 %v690, 12
      %v824 = vpop.permute.xlu0 %823
      %825 = vrot.lane.b32.xlu0 %v702, 12
      %v826 = vpop.permute.xlu0 %825
      %827 = vrot.lane.b32.xlu0 %v714, 12
      %v828 = vpop.permute.xlu0 %827
      %829 = vrot.lane.b32.xlu0 %v798, 12
      %v830 = vpop.permute.xlu0 %829
      %vm831 = vcmask 31744
      %v833 = vsel %vm831, %v458, %v716
      %v835 = vsel %vm831, %v459, %v718
      %v837 = vsel %vm831, %v460, %v720
      %v839 = vsel %vm831, %v461, %v722
      %v841 = vsel %vm831, %v462, %v724
      %v843 = vsel %vm831, %v463, %v726
      %v845 = vsel %vm831, %v464, %v728
      %v847 = vsel %vm831, %v465, %v730
      %v849 = vsel %vm831, %v466, %v732
      %v851 = vsel %vm831, %v467, %v734
      %v853 = vsel %vm831, %v468, %v736
      %v855 = vsel %vm831, %v469, %v738
      %v857 = vsel %vm831, %v470, %v740
      %v859 = vsel %vm831, %v471, %v742
      %v861 = vsel %vm831, %v472, %v744
      %v863 = vsel %vm831, %v473, %v746
      %vm864 = vcmask 64512
      %v866 = vsel %vm864, %v833, %v753
      %v868 = vsel %vm864, %v835, %v755
      %v870 = vsel %vm864, %v837, %v757
      %v872 = vsel %vm864, %v839, %v759
      %v874 = vsel %vm864, %v841, %v761
      %v876 = vsel %vm864, %v843, %v763
      %v878 = vsel %vm864, %v845, %v765
      %v880 = vsel %vm864, %v847, %v767
      %v882 = vsel %vm864, %v849, %v769
      %v884 = vsel %vm864, %v851, %v771
      %v886 = vsel %vm864, %v853, %v773
      %v888 = vsel %vm864, %v855, %v775
      %v890 = vsel %vm864, %v857, %v777
      %v892 = vsel %vm864, %v859, %v779
      %v894 = vsel %vm864, %v861, %v781
      %v896 = vsel %vm864, %v863, %v783
      %vm897 = vcmask 97280
      %v899 = vsel %vm897, %v866, %v800
      %v901 = vsel %vm897, %v868, %v802
      %v903 = vsel %vm897, %v870, %v804
      %v905 = vsel %vm897, %v872, %v806
      %v907 = vsel %vm897, %v874, %v808
      %v909 = vsel %vm897, %v876, %v810
      %v911 = vsel %vm897, %v878, %v812
      %v913 = vsel %vm897, %v880, %v814
      %v915 = vsel %vm897, %v882, %v816
      %v917 = vsel %vm897, %v884, %v818
      %v919 = vsel %vm897, %v886, %v820
      %v921 = vsel %vm897, %v888, %v822
      %v923 = vsel %vm897, %v890, %v824
      %v925 = vsel %vm897, %v892, %v826
      %v927 = vsel %vm897, %v894, %v828
      %v929 = vsel %vm897, %v896, %v830
      %v930 = vld [vmem:[%s2] sm:$0xf]
      %v931 = vld [vmem:[%s2 + $0x4] sm:$0xf]
      %v934 = vunpack.c.l.b16 %v930
      %v935 = vunpack.c.l.b16 %v931
      %v936 = vpack.c.b16 %v935, %v934
      %vm938 = vcmask 130048
      %v939 = vsel %vm938, %v899, 0
      %v941 = vsel %vm938, %v901, 0
      %v943 = vsel %vm938, %v903, 0
      %v945 = vsel %vm938, %v905, 0
      %v947 = vsel %vm938, %v907, 0
      %v949 = vsel %vm938, %v909, 0
      %v951 = vsel %vm938, %v911, 0
      %v953 = vsel %vm938, %v913, 0
      %v955 = vsel %vm938, %v915, 0
      %v957 = vsel %vm938, %v917, 0
      %v959 = vsel %vm938, %v919, 0
      %v961 = vsel %vm938, %v921, 0
      %v963 = vsel %vm938, %v923, 0
      %v965 = vsel %vm938, %v925, 0
      %v967 = vsel %vm938, %v927, 0
      %v969 = vsel %vm938, %v929, 0
      %971 = vmatprep.subr.bf16.mxu0 0
      %972 = vmatpush1.bf16.msra.mxu0 0
      %973 = vmatprep.subr.bf16.mxu0 0
      %974 = vmatpush1.bf16.msra.mxu0 0
      %975 = vmatprep.subr.bf16.mxu0 0
      %976 = vmatpush1.bf16.msra.mxu0 0
      %977 = vmatprep.subr.bf16.mxu0 0
      %978 = vmatpush1.bf16.msra.mxu0 0
      %979 = vmatprep.subr.bf16.mxu0 0
      %980 = vmatpush1.bf16.msra.mxu0 0
      %981 = vmatprep.subr.bf16.mxu0 0
      %982 = vmatpush1.bf16.msra.mxu0 0
      %983 = vmatprep.subr.bf16.mxu0 0
      %984 = vmatpush1.bf16.msra.mxu0 0
      %985 = vmatprep.subr.bf16.mxu0 0
      %986 = vmatpush1.bf16.msra.mxu0 %v936
      %987 = vmatprep.subr.bf16.mxu0 0
      %988 = vmatpush2.bf16.msra.mxu0 0
      %989 = vmatprep.subr.bf16.mxu0 0
      %990 = vmatpush2.bf16.msra.mxu0 0
      %991 = vmatprep.subr.bf16.mxu0 0
      %992 = vmatpush2.bf16.msra.mxu0 0
      %993 = vmatprep.subr.bf16.mxu0 0
      %994 = vmatpush2.bf16.msra.mxu0 0
      %995 = vmatprep.subr.bf16.mxu0 0
      %996 = vmatpush2.bf16.msra.mxu0 0
      %997 = vmatprep.subr.bf16.mxu0 0
      %998 = vmatpush2.bf16.msra.mxu0 0
      %999 = vmatprep.subr.bf16.mxu0 0
      %1000 = vmatpush2.bf16.msra.mxu0 0
      %1001 = vmatprep.subr.bf16.mxu0 0
      %1002 = vmatpush2.bf16.msra.mxu0 0
      %1003 = vmatprep.mubr.bf16.mxu0 0
      %1004 = vmatmul.mubr.bf16.gmra.mxu0 %v939
      %v1005 = vpop.f32.mrf.mxu0
      %v1006 = vadd.f32 0.0, %v1005
      %v1007 = vpop.f32.mrf.mxu0
      %v1008 = vpop.f32.mrf.mxu0
      %v1009 = vadd.f32 0.0, %v1008
      %v1010 = vpop.f32.mrf.mxu0
      %1011 = vmatprep.mubr.bf16.mxu0 0
      %1012 = vmatmul.mubr.bf16.gmra.mxu0 %v941
      %v1013 = vpop.f32.mrf.mxu0
      %v1014 = vadd.f32 0.0, %v1013
      %v1015 = vpop.f32.mrf.mxu0
      %v1016 = vpop.f32.mrf.mxu0
      %v1017 = vadd.f32 0.0, %v1016
      %v1018 = vpop.f32.mrf.mxu0
      %1019 = vmatprep.mubr.bf16.mxu0 0
      %1020 = vmatmul.mubr.bf16.gmra.mxu0 %v943
      %v1021 = vpop.f32.mrf.mxu0
      %v1022 = vadd.f32 0.0, %v1021
      %v1023 = vpop.f32.mrf.mxu0
      %v1024 = vpop.f32.mrf.mxu0
      %v1025 = vadd.f32 0.0, %v1024
      %v1026 = vpop.f32.mrf.mxu0
      %1027 = vmatprep.mubr.bf16.mxu0 0
      %1028 = vmatmul.mubr.bf16.gmra.mxu0 %v945
      %v1029 = vpop.f32.mrf.mxu0
      %v1030 = vadd.f32 0.0, %v1029
      %v1031 = vpop.f32.mrf.mxu0
      %v1032 = vpop.f32.mrf.mxu0
      %v1033 = vadd.f32 0.0, %v1032
      %v1034 = vpop.f32.mrf.mxu0
      %1035 = vmatprep.mubr.bf16.mxu0 0
      %1036 = vmatmul.mubr.bf16.gmra.mxu0 %v947
      %v1037 = vpop.f32.mrf.mxu0
      %v1038 = vadd.f32 0.0, %v1037
      %v1039 = vpop.f32.mrf.mxu0
      %v1040 = vpop.f32.mrf.mxu0
      %v1041 = vadd.f32 0.0, %v1040
      %v1042 = vpop.f32.mrf.mxu0
      %1043 = vmatprep.mubr.bf16.mxu0 0
      %1044 = vmatmul.mubr.bf16.gmra.mxu0 %v949
      %v1045 = vpop.f32.mrf.mxu0
      %v1046 = vadd.f32 0.0, %v1045
      %v1047 = vpop.f32.mrf.mxu0
      %v1048 = vpop.f32.mrf.mxu0
      %v1049 = vadd.f32 0.0, %v1048
      %v1050 = vpop.f32.mrf.mxu0
      %1051 = vmatprep.mubr.bf16.mxu0 0
      %1052 = vmatmul.mubr.bf16.gmra.mxu0 %v951
      %v1053 = vpop.f32.mrf.mxu0
      %v1054 = vadd.f32 0.0, %v1053
      %v1055 = vpop.f32.mrf.mxu0
      %v1056 = vpop.f32.mrf.mxu0
      %v1057 = vadd.f32 0.0, %v1056
      %v1058 = vpop.f32.mrf.mxu0
      %1059 = vmatprep.mubr.bf16.mxu0 0
      %1060 = vmatmul.mubr.bf16.gmra.mxu0 %v953
      %v1061 = vpop.f32.mrf.mxu0
      %v1062 = vadd.f32 0.0, %v1061
      %v1063 = vpop.f32.mrf.mxu0
      %v1064 = vpop.f32.mrf.mxu0
      %v1065 = vadd.f32 0.0, %v1064
      %v1066 = vpop.f32.mrf.mxu0
      %1067 = vmatprep.mubr.bf16.mxu0 0
      %1068 = vmatmul.mubr.bf16.gmra.mxu0 %v955
      %v1069 = vpop.f32.mrf.mxu0
      %v1070 = vadd.f32 0.0, %v1069
      %v1071 = vpop.f32.mrf.mxu0
      %v1072 = vpop.f32.mrf.mxu0
      %v1073 = vadd.f32 0.0, %v1072
      %v1074 = vpop.f32.mrf.mxu0
      %1075 = vmatprep.mubr.bf16.mxu0 0
      %1076 = vmatmul.mubr.bf16.gmra.mxu0 %v957
      %v1077 = vpop.f32.mrf.mxu0
      %v1078 = vadd.f32 0.0, %v1077
      %v1079 = vpop.f32.mrf.mxu0
      %v1080 = vpop.f32.mrf.mxu0
      %v1081 = vadd.f32 0.0, %v1080
      %v1082 = vpop.f32.mrf.mxu0
      %1083 = vmatprep.mubr.bf16.mxu0 0
      %1084 = vmatmul.mubr.bf16.gmra.mxu0 %v959
      %v1085 = vpop.f32.mrf.mxu0
      %v1086 = vadd.f32 0.0, %v1085
      %v1087 = vpop.f32.mrf.mxu0
      %v1088 = vpop.f32.mrf.mxu0
      %v1089 = vadd.f32 0.0, %v1088
      %v1090 = vpop.f32.mrf.mxu0
      %1091 = vmatprep.mubr.bf16.mxu0 0
      %1092 = vmatmul.mubr.bf16.gmra.mxu0 %v961
      %v1093 = vpop.f32.mrf.mxu0
      %v1094 = vadd.f32 0.0, %v1093
      %v1095 = vpop.f32.mrf.mxu0
      %v1096 = vpop.f32.mrf.mxu0
      %v1097 = vadd.f32 0.0, %v1096
      %v1098 = vpop.f32.mrf.mxu0
      %1099 = vmatprep.mubr.bf16.mxu0 0
      %1100 = vmatmul.mubr.bf16.gmra.mxu0 %v963
      %v1101 = vpop.f32.mrf.mxu0
      %v1102 = vadd.f32 0.0, %v1101
      %v1103 = vpop.f32.mrf.mxu0
      %v1104 = vpop.f32.mrf.mxu0
      %v1105 = vadd.f32 0.0, %v1104
      %v1106 = vpop.f32.mrf.mxu0
      %1107 = vmatprep.mubr.bf16.mxu0 0
      %1108 = vmatmul.mubr.bf16.gmra.mxu0 %v965
      %v1109 = vpop.f32.mrf.mxu0
      %v1110 = vadd.f32 0.0, %v1109
      %v1111 = vpop.f32.mrf.mxu0
      %v1112 = vpop.f32.mrf.mxu0
      %v1113 = vadd.f32 0.0, %v1112
      %v1114 = vpop.f32.mrf.mxu0
      %1115 = vmatprep.mubr.bf16.mxu0 0
      %1116 = vmatmul.mubr.bf16.gmra.mxu0 %v967
      %v1117 = vpop.f32.mrf.mxu0
      %v1118 = vadd.f32 0.0, %v1117
      %v1119 = vpop.f32.mrf.mxu0
      %v1120 = vpop.f32.mrf.mxu0
      %v1121 = vadd.f32 0.0, %v1120
      %v1122 = vpop.f32.mrf.mxu0
      %1123 = vmatprep.mubr.bf16.mxu0 0
      %1124 = vmatmul.mubr.bf16.gmra.mxu0 %v969
      %v1125 = vpop.f32.mrf.mxu0
      %v1126 = vadd.f32 0.0, %v1125
      %v1127 = vpop.f32.mrf.mxu0
      %v1128 = vpop.f32.mrf.mxu0
      %v1129 = vadd.f32 0.0, %v1128
      %v1130 = vpop.f32.mrf.mxu0
      %1131 = vdwg.mxu0
      %v1132 = vld [vmem:[%s3] sm:$0x1]
      %v1134 = vlaneseq
      %v1135 = vshrl.u32 %v1134, 7
      %v1136 = vsub.s32 0, %v1135
      %v1137 = vrot.slane %v1132, %v1136
      %v1139 = vmul.f32 %v1006, %v1137
      %v1140 = vmul.f32 %v1009, %v1137
      %v1141 = vmul.f32 %v1014, %v1137
      %v1142 = vmul.f32 %v1017, %v1137
      %v1143 = vmul.f32 %v1022, %v1137
      %v1144 = vmul.f32 %v1025, %v1137
      %v1145 = vmul.f32 %v1030, %v1137
      %v1146 = vmul.f32 %v1033, %v1137
      %v1147 = vmul.f32 %v1038, %v1137
      %v1148 = vmul.f32 %v1041, %v1137
      %v1149 = vmul.f32 %v1046, %v1137
      %v1150 = vmul.f32 %v1049, %v1137
      %v1151 = vmul.f32 %v1054, %v1137
      %v1152 = vmul.f32 %v1057, %v1137
      %v1153 = vmul.f32 %v1062, %v1137
      %v1154 = vmul.f32 %v1065, %v1137
      %v1155 = vmul.f32 %v1070, %v1137
      %v1156 = vmul.f32 %v1073, %v1137
      %v1157 = vmul.f32 %v1078, %v1137
      %v1158 = vmul.f32 %v1081, %v1137
      %v1159 = vmul.f32 %v1086, %v1137
      %v1160 = vmul.f32 %v1089, %v1137
      %v1161 = vmul.f32 %v1094, %v1137
      %v1162 = vmul.f32 %v1097, %v1137
      %v1163 = vmul.f32 %v1102, %v1137
      %v1164 = vmul.f32 %v1105, %v1137
      %v1165 = vmul.f32 %v1110, %v1137
      %v1166 = vmul.f32 %v1113, %v1137
      %v1167 = vmul.f32 %v1118, %v1137
      %v1168 = vmul.f32 %v1121, %v1137
      %v1169 = vmul.f32 %v1126, %v1137
      %v1170 = vmul.f32 %v1129, %v1137
      %v1171 = vld [vmem:[%s4] sm:$0x1]
      %v1173 = vlaneseq
      %v1174 = vshrl.u32 %v1173, 7
      %v1175 = vsub.s32 0, %v1174
      %v1176 = vrot.slane %v1171, %v1175
      %v1178 = vadd.f32 %v1139, %v1176
      %v1179 = vadd.f32 %v1140, %v1176
      %v1180 = vadd.f32 %v1141, %v1176
      %v1181 = vadd.f32 %v1142, %v1176
      %v1182 = vadd.f32 %v1143, %v1176
      %v1183 = vadd.f32 %v1144, %v1176
      %v1184 = vadd.f32 %v1145, %v1176
      %v1185 = vadd.f32 %v1146, %v1176
      %v1186 = vadd.f32 %v1147, %v1176
      %v1187 = vadd.f32 %v1148, %v1176
      %v1188 = vadd.f32 %v1149, %v1176
      %v1189 = vadd.f32 %v1150, %v1176
      %v1190 = vadd.f32 %v1151, %v1176
      %v1191 = vadd.f32 %v1152, %v1176
      %v1192 = vadd.f32 %v1153, %v1176
      %v1193 = vadd.f32 %v1154, %v1176
      %v1194 = vadd.f32 %v1155, %v1176
      %v1195 = vadd.f32 %v1156, %v1176
      %v1196 = vadd.f32 %v1157, %v1176
      %v1197 = vadd.f32 %v1158, %v1176
      %v1198 = vadd.f32 %v1159, %v1176
      %v1199 = vadd.f32 %v1160, %v1176
      %v1200 = vadd.f32 %v1161, %v1176
      %v1201 = vadd.f32 %v1162, %v1176
      %v1202 = vadd.f32 %v1163, %v1176
      %v1203 = vadd.f32 %v1164, %v1176
      %v1204 = vadd.f32 %v1165, %v1176
      %v1205 = vadd.f32 %v1166, %v1176
      %v1206 = vadd.f32 %v1167, %v1176
      %v1207 = vadd.f32 %v1168, %v1176
      %v1208 = vadd.f32 %v1169, %v1176
      %v1209 = vadd.f32 %v1170, %v1176
      %v1210 = vmax.f32 %v1178, 0.0
      %v1211 = vmax.f32 %v1179, 0.0
      %v1212 = vmax.f32 %v1180, 0.0
      %v1213 = vmax.f32 %v1181, 0.0
      %v1214 = vmax.f32 %v1182, 0.0
      %v1215 = vmax.f32 %v1183, 0.0
      %v1216 = vmax.f32 %v1184, 0.0
      %v1217 = vmax.f32 %v1185, 0.0
      %v1218 = vmax.f32 %v1186, 0.0
      %v1219 = vmax.f32 %v1187, 0.0
      %v1220 = vmax.f32 %v1188, 0.0
      %v1221 = vmax.f32 %v1189, 0.0
      %v1222 = vmax.f32 %v1190, 0.0
      %v1223 = vmax.f32 %v1191, 0.0
      %v1224 = vmax.f32 %v1192, 0.0
      %v1225 = vmax.f32 %v1193, 0.0
      %v1226 = vmax.f32 %v1194, 0.0
      %v1227 = vmax.f32 %v1195, 0.0
      %v1228 = vmax.f32 %v1196, 0.0
      %v1229 = vmax.f32 %v1197, 0.0
      %v1230 = vmax.f32 %v1198, 0.0
      %v1231 = vmax.f32 %v1199, 0.0
      %v1232 = vmax.f32 %v1200, 0.0
      %v1233 = vmax.f32 %v1201, 0.0
      %v1234 = vmax.f32 %v1202, 0.0
      %v1235 = vmax.f32 %v1203, 0.0
      %v1236 = vmax.f32 %v1204, 0.0
      %v1237 = vmax.f32 %v1205, 0.0
      %v1238 = vmax.f32 %v1206, 0.0
      %v1239 = vmax.f32 %v1207, 0.0
      %v1240 = vmax.f32 %v1208, 0.0
      %v1241 = vmax.f32 %v1209, 0.0
      %v1242 = vpack.c.bf16 %v1211, %v1210
      %v1243 = vpack.c.bf16 %v1213, %v1212
      %v1244 = vpack.c.bf16 %v1215, %v1214
      %v1245 = vpack.c.bf16 %v1217, %v1216
      %v1246 = vpack.c.bf16 %v1219, %v1218
      %v1247 = vpack.c.bf16 %v1221, %v1220
      %v1248 = vpack.c.bf16 %v1223, %v1222
      %v1249 = vpack.c.bf16 %v1225, %v1224
      %v1250 = vpack.c.bf16 %v1227, %v1226
      %v1251 = vpack.c.bf16 %v1229, %v1228
      %v1252 = vpack.c.bf16 %v1231, %v1230
      %v1253 = vpack.c.bf16 %v1233, %v1232
      %v1254 = vpack.c.bf16 %v1235, %v1234
      %v1255 = vpack.c.bf16 %v1237, %v1236
      %v1256 = vpack.c.bf16 %v1239, %v1238
      %v1257 = vpack.c.bf16 %v1241, %v1240
      %v1274 = vunpack.c.l.b16 %v1242
      %v1275 = vunpack.c.h.b16 %v1242
      %v1276 = vunpack.c.l.b16 %v1243
      %v1277 = vunpack.c.h.b16 %v1243
      %v1278 = vunpack.c.l.b16 %v1244
      %v1279 = vunpack.c.h.b16 %v1244
      %v1280 = vunpack.c.l.b16 %v1245
      %v1281 = vunpack.c.h.b16 %v1245
      %v1282 = vunpack.c.l.b16 %v1246
      %v1283 = vunpack.c.h.b16 %v1246
      %v1284 = vunpack.c.l.b16 %v1247
      %v1285 = vunpack.c.h.b16 %v1247
      %v1286 = vunpack.c.l.b16 %v1248
      %v1287 = vunpack.c.h.b16 %v1248
      %v1288 = vunpack.c.l.b16 %v1249
      %v1289 = vunpack.c.h.b16 %v1249
      %v1290 = vunpack.c.l.b16 %v1250
      %v1291 = vunpack.c.h.b16 %v1250
      %v1292 = vunpack.c.l.b16 %v1251
      %v1293 = vunpack.c.h.b16 %v1251
      %v1294 = vunpack.c.l.b16 %v1252
      %v1295 = vunpack.c.h.b16 %v1252
      %v1296 = vunpack.c.l.b16 %v1253
      %v1297 = vunpack.c.h.b16 %v1253
      %v1298 = vunpack.c.l.b16 %v1254
      %v1299 = vunpack.c.h.b16 %v1254
      %v1300 = vunpack.c.l.b16 %v1255
      %v1301 = vunpack.c.h.b16 %v1255
      %v1302 = vunpack.c.l.b16 %v1256
      %v1303 = vunpack.c.h.b16 %v1256
      %v1304 = vunpack.c.l.b16 %v1257
      %v1305 = vunpack.c.h.b16 %v1257
      %v1306 = vpack.c.b16 %v1274, %v1274
      %v1307 = vpack.c.b16 %v1275, %v1275
      %v1308 = vpack.c.b16 %v1276, %v1276
      %v1309 = vpack.c.b16 %v1277, %v1277
      %v1310 = vpack.c.b16 %v1278, %v1278
      %v1311 = vpack.c.b16 %v1279, %v1279
      %v1312 = vpack.c.b16 %v1280, %v1280
      %v1313 = vpack.c.b16 %v1281, %v1281
      %v1314 = vpack.c.b16 %v1282, %v1282
      %v1315 = vpack.c.b16 %v1283, %v1283
      %v1316 = vpack.c.b16 %v1284, %v1284
      %v1317 = vpack.c.b16 %v1285, %v1285
      %v1318 = vpack.c.b16 %v1286, %v1286
      %v1319 = vpack.c.b16 %v1287, %v1287
      %v1320 = vpack.c.b16 %v1288, %v1288
      %v1321 = vpack.c.b16 %v1289, %v1289
      %v1322 = vpack.c.b16 %v1290, %v1290
      %v1323 = vpack.c.b16 %v1291, %v1291
      %v1324 = vpack.c.b16 %v1292, %v1292
      %v1325 = vpack.c.b16 %v1293, %v1293
      %v1326 = vpack.c.b16 %v1294, %v1294
      %v1327 = vpack.c.b16 %v1295, %v1295
      %v1328 = vpack.c.b16 %v1296, %v1296
      %v1329 = vpack.c.b16 %v1297, %v1297
      %v1330 = vpack.c.b16 %v1298, %v1298
      %v1331 = vpack.c.b16 %v1299, %v1299
      %v1332 = vpack.c.b16 %v1300, %v1300
      %v1333 = vpack.c.b16 %v1301, %v1301
      %v1334 = vpack.c.b16 %v1302, %v1302
      %v1335 = vpack.c.b16 %v1303, %v1303
      %v1336 = vpack.c.b16 %v1304, %v1304
      %v1337 = vpack.c.b16 %v1305, %v1305
      %1370 = vst [vmem:[%s340] sm:$0xf] %v1306
      %1371 = vst [vmem:[%s340 + $0x4] sm:$0xf] %v1307
      %1372 = vst [vmem:[%s340 + $0x8] sm:$0xf] %v1308
      %1373 = vst [vmem:[%s340 + $0xc] sm:$0xf] %v1309
      %1374 = vst [vmem:[%s340 + $0x10] sm:$0xf] %v1310
      %1375 = vst [vmem:[%s340 + $0x14] sm:$0xf] %v1311
      %1376 = vst [vmem:[%s340 + $0x18] sm:$0xf] %v1312
      %1377 = vst [vmem:[%s340 + $0x1c] sm:$0xf] %v1313
      %1378 = vst [vmem:[%s340 + $0x20] sm:$0xf] %v1314
      %1379 = vst [vmem:[%s340 + $0x24] sm:$0xf] %v1315
      %1380 = vst [vmem:[%s340 + $0x28] sm:$0xf] %v1316
      %1381 = vst [vmem:[%s340 + $0x2c] sm:$0xf] %v1317
      %1382 = vst [vmem:[%s340 + $0x30] sm:$0xf] %v1318
      %1383 = vst [vmem:[%s340 + $0x34] sm:$0xf] %v1319
      %1384 = vst [vmem:[%s340 + $0x38] sm:$0xf] %v1320
      %1385 = vst [vmem:[%s340 + $0x3c] sm:$0xf] %v1321
      %1386 = vst [vmem:[%s340 + $0x40] sm:$0xf] %v1322
      %1387 = vst [vmem:[%s340 + $0x44] sm:$0xf] %v1323
      %1388 = vst [vmem:[%s340 + $0x48] sm:$0xf] %v1324
      %1389 = vst [vmem:[%s340 + $0x4c] sm:$0xf] %v1325
      %1390 = vst [vmem:[%s340 + $0x50] sm:$0xf] %v1326
      %1391 = vst [vmem:[%s340 + $0x54] sm:$0xf] %v1327
      %1392 = vst [vmem:[%s340 + $0x58] sm:$0xf] %v1328
      %1393 = vst [vmem:[%s340 + $0x5c] sm:$0xf] %v1329
      %1394 = vst [vmem:[%s340 + $0x60] sm:$0xf] %v1330
      %1395 = vst [vmem:[%s340 + $0x64] sm:$0xf] %v1331
      %1396 = vst [vmem:[%s340 + $0x68] sm:$0xf] %v1332
      %1397 = vst [vmem:[%s340 + $0x6c] sm:$0xf] %v1333
      %1398 = vst [vmem:[%s340 + $0x70] sm:$0xf] %v1334
      %1399 = vst [vmem:[%s340 + $0x74] sm:$0xf] %v1335
      %1400 = vst [vmem:[%s340 + $0x78] sm:$0xf] %v1336
      %1401 = vst [vmem:[%s340 + $0x7c] sm:$0xf] %v1337
      %s1402 = smul.u32 16, %s21
      %p1403 = scmp.lt.s32.totalorder %s20, 1
      %s1404 = scalar_select %p1403, %s20, 1
      %p1405 = scmp.lt.s32.totalorder %s1402, 15
      %s1406 = scalar_select %p1405, %s1402, 15
      %s1407 = smul.addr %s1406, 2
      %s1408 = smul.addr %s1404, 32
      %s1409 = sadd.s32 %s1407, %s1408
      %s1410 = smul.addr %s1409, 4
      %s1411 = scalar_lea.vmem %s5, %s1410
      // Predicated region
      $region41: #{_forward.1} parent=39 // pred_check
        %p1412 = pneg %p171
      $region42: #{_forward.1} parent=39 // pred_check_branch
        %1414 = sbr.rel (%p1412) target = $region44
      $region43: #{_forward.1} parent=39 // pred_region
        %s1415 = smul.u32 16, %s21
      $region44: #{_forward.1} parent=39 // pred_fallthru
        _
    $region40: #{_forward.1} parent=5 // pred_fallthru
      _
    %p1416 = scmp.le.s32.totalorder 2, %s11
    // Predicated region
    $region45: #{_forward.1} parent=5 // pred_check
      %p1417 = pneg %p1416
    $region46: #{_forward.1} parent=5 // pred_check_branch
      %1419 = sbr.rel (%p1417) target = $region48
    $region47: #{_forward.1} parent=5 // pred_region
      %s1420 = ssub.s32 %s11, 2
      // Predicated region
      $region49: #{_forward.1} parent=47 // pred_check
        %p1421 = pneg %p177
      $region50: #{_forward.1} parent=47 // pred_check_branch
        %1423 = sbr.rel (%p1421) target = $region52
      $region51: #{_forward.1} parent=47 // pred_region
        %s1424 = smul.u32 16, %s23
        %p1425 = scmp.lt.s32.totalorder %s22, 1
        %s1426 = scalar_select %p1425, %s22, 1
        %p1427 = scmp.lt.s32.totalorder %s1424, 15
        %s1428 = scalar_select %p1427, %s1424, 15
        %s1429 = smul.addr %s1428, 2
        %s1430 = smul.addr %s1426, 32
        %s1431 = sadd.s32 %s1429, %s1430
        %s1432 = smul.addr %s1431, 4
        %s1433 = scalar_lea.vmem %s5, %s1432
      $region52: #{_forward.1} parent=47 // pred_fallthru
        _
    $region48: #{_forward.1} parent=5 // pred_fallthru
      _
  $region6: #{_forward.1} parent=0 // loop_footer
    %s15 = sadd.s32 1, %s11
  $region7: #{_forward.1} parent=0 // loop_footer_branch
    %10 = sbr.rel target = $region3
  $region8: #{_forward.1} parent=0 // loop_exit
    _

</llo_original>
